<compile_context>
chip_gen: v6e
topology: v6e:2x2x1
jax: 0.10.0
libtpu: 0.0.40
codegen_flags: <defaults>
</compile_context>

<pallas_src>
import functools

import numpy as np
import jax
import jax.numpy as jnp
from jax.experimental import pallas as pl
from jax.experimental.pallas import tpu as pltpu

_LANE = 128                      # TPU lane width
_PADL = 8                        # sublane-aligned halo offset inside the scratch
_TARGET_BLOCK_BYTES = 2 << 20    # ~2 MiB input block per grid step
_MAX_SINGLE_BLOCK_BYTES = 4 << 20


def _blur_taps_1d(kernel=(1, 2, 1), flip=False):
    k = [float(v) for v in kernel]
    if flip:
        k = k[::-1]
    return tuple(k)


def _scaled(tap, v):
    # `tap` is a static Python float, resolved at trace time.
    if tap == 1.0:
        return v
    if tap == 2.0:
        return v + v            # add instead of multiply
    return tap * v


def _blur_kernel(x_ref, o_ref, pad_ref, *, taps, norm):
    # x_ref / o_ref : (H, W, TC)              channels-last block (channels -> lanes)
    # pad_ref       : (H+2, W+2*_PADL, TC)    f32 zero-padded tile (halo in-kernel)
    H, W, TC = o_ref.shape
    f32 = jnp.float32
    k0, k1, k2 = taps

    # Build the zero-padded tile in VMEM (no extra HBM pass for padding).
    # Full-scratch zero fill + interior stored at column offset _PADL (multiple
    # of 8) keeps every store sublane-aligned.
    pad_ref[...] = jnp.zeros(pad_ref.shape, f32)
    pad_ref[1:H + 1, _PADL:_PADL + W, :] = x_ref[...].astype(f32)

    c0, c1 = _PADL - 1, _PADL + W + 1      # interior +/- one halo column
    # Vertical pass: shifts along the leading dim are just row offsets (free).
    t = (_scaled(k0, pad_ref[0:H, c0:c1, :])
         + _scaled(k1, pad_ref[1:H + 1, c0:c1, :])
         + _scaled(k2, pad_ref[2:H + 2, c0:c1, :]))
    # Horizontal pass: sublane shifts on the (H, W+2, TC) intermediate.
    y = (_scaled(k0, t[:, 0:W, :])
         + _scaled(k1, t[:, 1:W + 1, :])
         + _scaled(k2, t[:, 2:W + 2, :]))
    if norm != 1.0:
        y = y * norm
    o_ref[...] = y.astype(o_ref.dtype)


def _pick_channel_tile(nc, plane_bytes, target_bytes=_TARGET_BLOCK_BYTES):
    """Channel tile: a multiple of 128 (lane width) unless it spans all channels."""
    if nc % _LANE != 0:
        return nc                # "last block dim == full array dim" is legal
    tc = _LANE
    while (nc % (2 * tc) == 0
           and plane_bytes * 2 * tc <= target_bytes
           and nc // (2 * tc) >= 2):   # keep >=2 grid steps for megacore (v7x)
        tc *= 2
    return tc


def blur_layer(x, kernel=(1, 2, 1), normalize=True, flip=False, stride=1):
    """Pallas TPU equivalent of BlurLayer.forward on NCHW input `x`."""
    N, C, H, W = x.shape
    taps = _blur_taps_1d(kernel, flip)
    assert len(taps) == 3, "BlurLayer uses a fixed length-3 kernel"
    norm = (1.0 / float(np.outer(taps, taps).sum())) if normalize else 1.0

    nc = N * C
    plane_bytes = H * W * x.dtype.itemsize

    # Lane-dense, channels-last layout.
    xt = jnp.transpose(x, (2, 3, 0, 1)).reshape(H, W, nc)

    tc = _pick_channel_tile(nc, plane_bytes)
    nc_padded = nc
    if tc == nc and nc > _LANE and plane_bytes * nc > _MAX_SINGLE_BLOCK_BYTES:
        # Channel count not a lane multiple but too big for a single block:
        # pad channels up to a lane multiple so they can be tiled.
        nc_padded = ((nc + _LANE - 1) // _LANE) * _LANE
        xt = jnp.pad(xt, ((0, 0), (0, 0), (0, nc_padded - nc)))
        tc = _pick_channel_tile(nc_padded, plane_bytes)

    grid = (nc_padded // tc,)

    out = pl.pallas_call(
        functools.partial(_blur_kernel, taps=taps, norm=norm),
        out_shape=jax.ShapeDtypeStruct((H, W, nc_padded), x.dtype),
        grid_spec=pltpu.PrefetchScalarGridSpec(
            num_scalar_prefetch=0,
            grid=grid,
            in_specs=[pl.BlockSpec((H, W, tc), lambda c: (0, 0, c))],
            out_specs=pl.BlockSpec((H, W, tc), lambda c: (0, 0, c)),
            scratch_shapes=[
                pltpu.VMEM((H + 2, W + 2 * _PADL, tc), jnp.float32),
            ],
        ),
        compiler_params=pltpu.CompilerParams(
            dimension_semantics=("parallel",),
            vmem_limit_bytes=32 * 1024 * 1024,
        ),
    )(xt)

    if nc_padded != nc:
        out = out[:, :, :nc]
    out = out.reshape(H, W, N, C).transpose(2, 3, 0, 1)
    if stride != 1:
        # TODO(synk): move the stride subsampling into the kernel store.
        out = out[:, :, ::stride, ::stride]
    return out


def _reference_blur(x, kernel=(1, 2, 1), normalize=True, flip=False, stride=1):
    k = np.asarray(kernel, dtype=np.float32)
    k2 = k[:, None] * k[None, :]
    if normalize:
        k2 = k2 / k2.sum()
    if flip:
        k2 = k2[::-1, ::-1]
    C = x.shape[1]
    w = jnp.asarray(np.ascontiguousarray(k2))[None, None, :, :]
    w = jnp.broadcast_to(w, (C, 1, 3, 3))
    return jax.lax.conv_general_dilated(
        x, w,
        window_strides=(stride, stride),
        padding=((1, 1), (1, 1)),
        dimension_numbers=("NCHW", "OIHW", "NCHW"),
        feature_group_count=C,
    )


if __name__ == "__main__":
    key = jax.random.PRNGKey(0)
    key1, key2 = jax.random.split(key)

    # Primary test: module-implied small shape (channel tile == full N*C).
    x = jax.random.normal(key1, (2, 4, 16, 16), dtype=jnp.float32)
    y = jax.block_until_ready(blur_layer(x))
    y_ref = jax.block_until_ready(_reference_blur(x))
    assert y.shape == (2, 4, 16, 16)
    np.testing.assert_allclose(np.asarray(y), np.asarray(y_ref),
                               rtol=1e-5, atol=1e-5)

    # Second test: exercises the lane-tiled (tc=128), multi-grid-step path.
    x2 = jax.random.normal(key2, (4, 64, 32, 32), dtype=jnp.float32)  # N*C = 256
    y2 = jax.block_until_ready(blur_layer(x2))
    y2_ref = jax.block_until_ready(_reference_blur(x2))
    np.testing.assert_allclose(np.asarray(y2), np.asarray(y2_ref),
                               rtol=1e-5, atol=1e-5)

    print("KERNEL_OK")
</pallas_src>

<mosaic_0001>
module attributes {stable_mosaic.version = 11 : i64} {
  func.func @_blur_kernel(%arg0: i32, %arg1: memref<16x16x8xf32, #tpu.memory_space<vmem>>, %arg2: memref<16x16x8xf32, #tpu.memory_space<vmem>>, %arg3: memref<18x32x8xf32, #tpu.memory_space<vmem>>) attributes {dimension_semantics = [#tpu.dimension_semantics<parallel>], iteration_bounds = array<i64: 1>, scalar_prefetch = 0 : i64, scratch_operands = 1 : i64, tpu.core_type = #tpu.core_type<tc>, window_params = [{transform_indices = @transform_0, window_bounds = array<i64: 16, 16, 8>}, {transform_indices = @transform_1, window_bounds = array<i64: 16, 16, 8>}]} {
    %cst = arith.constant 0.000000e+00 : f32
    %0 = vector.broadcast %cst : f32 to vector<18x32x8xf32>
    %c0 = arith.constant 0 : index
    %c0_0 = arith.constant 0 : index
    %c0_1 = arith.constant 0 : index
    %1 = vector.load %arg3[%c0, %c0_0, %c0_1] : memref<18x32x8xf32, #tpu.memory_space<vmem>>, vector<18x32x8xf32>
    tpu.vector_store %arg3[%c0, %c0_0, %c0_1], %0 {strides = array<i32>} : memref<18x32x8xf32, #tpu.memory_space<vmem>>, vector<18x32x8xf32>,
    %c0_2 = arith.constant 0 : index
    %c0_3 = arith.constant 0 : index
    %c0_4 = arith.constant 0 : index
    %2 = vector.load %arg1[%c0_2, %c0_3, %c0_4] : memref<16x16x8xf32, #tpu.memory_space<vmem>>, vector<16x16x8xf32>
    %c1 = arith.constant 1 : index
    %c8 = arith.constant 8 : index
    %c0_5 = arith.constant 0 : index
    %3 = vector.load %arg3[%c1, %c8, %c0_5] : memref<18x32x8xf32, #tpu.memory_space<vmem>>, vector<16x16x8xf32>
    tpu.vector_store %arg3[%c1, %c8, %c0_5], %2 {strides = array<i32>} : memref<18x32x8xf32, #tpu.memory_space<vmem>>, vector<16x16x8xf32>,
    %c0_6 = arith.constant 0 : index
    %c7 = arith.constant 7 : index
    %c0_7 = arith.constant 0 : index
    %4 = vector.load %arg3[%c0_6, %c7, %c0_7] : memref<18x32x8xf32, #tpu.memory_space<vmem>>, vector<16x18x8xf32>
    %c1_8 = arith.constant 1 : index
    %c7_9 = arith.constant 7 : index
    %c0_10 = arith.constant 0 : index
    %5 = vector.load %arg3[%c1_8, %c7_9, %c0_10] : memref<18x32x8xf32, #tpu.memory_space<vmem>>, vector<16x18x8xf32>
    %6 = arith.addf %5, %5 : vector<16x18x8xf32>
    %7 = arith.addf %4, %6 : vector<16x18x8xf32>
    %c2 = arith.constant 2 : index
    %c7_11 = arith.constant 7 : index
    %c0_12 = arith.constant 0 : index
    %8 = vector.load %arg3[%c2, %c7_11, %c0_12] : memref<18x32x8xf32, #tpu.memory_space<vmem>>, vector<16x18x8xf32>
    %9 = arith.addf %7, %8 : vector<16x18x8xf32>
    %10 = vector.extract_strided_slice %9 {offsets = [0, 0, 0], sizes = [16, 16, 8], strides = [1, 1, 1]} : vector<16x18x8xf32> to vector<16x16x8xf32>
    %11 = vector.extract_strided_slice %9 {offsets = [0, 1, 0], sizes = [16, 16, 8], strides = [1, 1, 1]} : vector<16x18x8xf32> to vector<16x16x8xf32>
    %12 = arith.addf %11, %11 : vector<16x16x8xf32>
    %13 = arith.addf %10, %12 : vector<16x16x8xf32>
    %14 = vector.extract_strided_slice %9 {offsets = [0, 2, 0], sizes = [16, 16, 8], strides = [1, 1, 1]} : vector<16x18x8xf32> to vector<16x16x8xf32>
    %15 = arith.addf %13, %14 : vector<16x16x8xf32>
    %cst_13 = arith.constant 6.250000e-02 : f32
    %16 = vector.broadcast %cst_13 : f32 to vector<16x16x8xf32>
    %17 = arith.mulf %15, %16 : vector<16x16x8xf32>
    %c0_14 = arith.constant 0 : index
    %c0_15 = arith.constant 0 : index
    %c0_16 = arith.constant 0 : index
    %18 = vector.load %arg2[%c0_14, %c0_15, %c0_16] : memref<16x16x8xf32, #tpu.memory_space<vmem>>, vector<16x16x8xf32>
    tpu.vector_store %arg2[%c0_14, %c0_15, %c0_16], %17 {strides = array<i32>} : memref<16x16x8xf32, #tpu.memory_space<vmem>>, vector<16x16x8xf32>,
    return
  }
  func.func @transform_0(%arg0: i32) -> (i32, i32, i32) {
    %c0_i32 = arith.constant 0 : i32
    %c0_i32_0 = arith.constant 0 : i32
    %c0_i32_1 = arith.constant 0 : i32
    return %c0_i32, %c0_i32_0, %arg0 : i32, i32, i32
  }
  func.func @transform_1(%arg0: i32) -> (i32, i32, i32) {
    %c0_i32 = arith.constant 0 : i32
    %c0_i32_0 = arith.constant 0 : i32
    %c0_i32_1 = arith.constant 0 : i32
    return %c0_i32, %c0_i32_0, %arg0 : i32, i32, i32
  }
}

</mosaic_0001>

<llo_original>
// kernel: tpu_custom_call.1
$region0: #{tpu_custom_call.1}
  #allocation0 [shape = 'u32[]', space=smem, size = 0x4, offset = 0x4, fixed_abs, tag = 'smem constant byte address 0x4 - core index']
  #allocation1 [shape = 'u32[144,128]{1,0:T(1,128)}', space=vmem, size = 0x12000, scoped, tag = 'internal scratch']
  #allocation2 [shape = 'f32[18,32,8]{2,1,0:T(8,128)}', space=vmem, size = 0x48000, scoped, tag = 'scratch operand']
  %s0 = inlined_call_operand.vmem [shape: f32[16,16,8], index: 0, kind: input, shape index: {}]
  %s1 = inlined_call_operand.vmem [shape: f32[16,16,8], index: 1, kind: output, shape index: {}]
  %s2 = sld [smem:[#allocation0]]
  $region14: #{tpu_custom_call.1} parent=0
    _
  %s4 = ssub.s32 1, %s2
  %s5 = scalar_select 0, %s4, %s2
  // Predicated region
  $region2: #{tpu_custom_call.1} parent=0 // pred_check
    _
  $region3: #{tpu_custom_call.1} parent=0 // pred_check_branch
    %7 = sbr.rel (0) target = $region5
  $region4: #{tpu_custom_call.1} parent=0 // pred_region
    _
  $region5: #{tpu_custom_call.1} parent=0 // pred_fallthru
    _
  %vm8 = vcmask 64512
  %9 = vst.msk [vmem:[#allocation2] sm:$0xff] %vm8, 0.0
  %10 = vst.msk [vmem:[#allocation2 + $0x8] sm:$0xff] %vm8, 0.0
  %11 = vst.msk [vmem:[#allocation2 + $0x10] sm:$0xff] %vm8, 0.0
  %12 = vst.msk [vmem:[#allocation2 + $0x18] sm:$0xff] %vm8, 0.0
  %13 = vst.msk [vmem:[#allocation2 + $0x20] sm:$0xff] %vm8, 0.0
  %14 = vst.msk [vmem:[#allocation2 + $0x28] sm:$0xff] %vm8, 0.0
  %15 = vst.msk [vmem:[#allocation2 + $0x30] sm:$0xff] %vm8, 0.0
  %16 = vst.msk [vmem:[#allocation2 + $0x38] sm:$0xff] %vm8, 0.0
  %17 = vst.msk [vmem:[#allocation2 + $0x40] sm:$0xff] %vm8, 0.0
  %18 = vst.msk [vmem:[#allocation2 + $0x48] sm:$0xff] %vm8, 0.0
  %19 = vst.msk [vmem:[#allocation2 + $0x50] sm:$0xff] %vm8, 0.0
  %20 = vst.msk [vmem:[#allocation2 + $0x58] sm:$0xff] %vm8, 0.0
  %21 = vst.msk [vmem:[#allocation2 + $0x60] sm:$0xff] %vm8, 0.0
  %22 = vst.msk [vmem:[#allocation2 + $0x68] sm:$0xff] %vm8, 0.0
  %23 = vst.msk [vmem:[#allocation2 + $0x70] sm:$0xff] %vm8, 0.0
  %24 = vst.msk [vmem:[#allocation2 + $0x78] sm:$0xff] %vm8, 0.0
  %25 = vst.msk [vmem:[#allocation2 + $0x80] sm:$0xff] %vm8, 0.0
  %26 = vst.msk [vmem:[#allocation2 + $0x88] sm:$0xff] %vm8, 0.0
  %27 = vst.msk [vmem:[#allocation2 + $0x90] sm:$0xff] %vm8, 0.0
  %28 = vst.msk [vmem:[#allocation2 + $0x98] sm:$0xff] %vm8, 0.0
  %29 = vst.msk [vmem:[#allocation2 + $0xa0] sm:$0xff] %vm8, 0.0
  %30 = vst.msk [vmem:[#allocation2 + $0xa8] sm:$0xff] %vm8, 0.0
  %31 = vst.msk [vmem:[#allocation2 + $0xb0] sm:$0xff] %vm8, 0.0
  %32 = vst.msk [vmem:[#allocation2 + $0xb8] sm:$0xff] %vm8, 0.0
  %33 = vst.msk [vmem:[#allocation2 + $0xc0] sm:$0xff] %vm8, 0.0
  %34 = vst.msk [vmem:[#allocation2 + $0xc8] sm:$0xff] %vm8, 0.0
  %35 = vst.msk [vmem:[#allocation2 + $0xd0] sm:$0xff] %vm8, 0.0
  %36 = vst.msk [vmem:[#allocation2 + $0xd8] sm:$0xff] %vm8, 0.0
  %37 = vst.msk [vmem:[#allocation2 + $0xe0] sm:$0xff] %vm8, 0.0
  %38 = vst.msk [vmem:[#allocation2 + $0xe8] sm:$0xff] %vm8, 0.0
  %39 = vst.msk [vmem:[#allocation2 + $0xf0] sm:$0xff] %vm8, 0.0
  %40 = vst.msk [vmem:[#allocation2 + $0xf8] sm:$0xff] %vm8, 0.0
  %41 = vst.msk [vmem:[#allocation2 + $0x100] sm:$0xff] %vm8, 0.0
  %42 = vst.msk [vmem:[#allocation2 + $0x108] sm:$0xff] %vm8, 0.0
  %43 = vst.msk [vmem:[#allocation2 + $0x110] sm:$0xff] %vm8, 0.0
  %44 = vst.msk [vmem:[#allocation2 + $0x118] sm:$0xff] %vm8, 0.0
  %45 = vst.msk [vmem:[#allocation2 + $0x120] sm:$0xff] %vm8, 0.0
  %46 = vst.msk [vmem:[#allocation2 + $0x128] sm:$0xff] %vm8, 0.0
  %47 = vst.msk [vmem:[#allocation2 + $0x130] sm:$0xff] %vm8, 0.0
  %48 = vst.msk [vmem:[#allocation2 + $0x138] sm:$0xff] %vm8, 0.0
  %49 = vst.msk [vmem:[#allocation2 + $0x140] sm:$0xff] %vm8, 0.0
  %50 = vst.msk [vmem:[#allocation2 + $0x148] sm:$0xff] %vm8, 0.0
  %51 = vst.msk [vmem:[#allocation2 + $0x150] sm:$0xff] %vm8, 0.0
  %52 = vst.msk [vmem:[#allocation2 + $0x158] sm:$0xff] %vm8, 0.0
  %53 = vst.msk [vmem:[#allocation2 + $0x160] sm:$0xff] %vm8, 0.0
  %54 = vst.msk [vmem:[#allocation2 + $0x168] sm:$0xff] %vm8, 0.0
  %55 = vst.msk [vmem:[#allocation2 + $0x170] sm:$0xff] %vm8, 0.0
  %56 = vst.msk [vmem:[#allocation2 + $0x178] sm:$0xff] %vm8, 0.0
  %57 = vst.msk [vmem:[#allocation2 + $0x180] sm:$0xff] %vm8, 0.0
  %58 = vst.msk [vmem:[#allocation2 + $0x188] sm:$0xff] %vm8, 0.0
  %59 = vst.msk [vmem:[#allocation2 + $0x190] sm:$0xff] %vm8, 0.0
  %60 = vst.msk [vmem:[#allocation2 + $0x198] sm:$0xff] %vm8, 0.0
  %61 = vst.msk [vmem:[#allocation2 + $0x1a0] sm:$0xff] %vm8, 0.0
  %62 = vst.msk [vmem:[#allocation2 + $0x1a8] sm:$0xff] %vm8, 0.0
  %63 = vst.msk [vmem:[#allocation2 + $0x1b0] sm:$0xff] %vm8, 0.0
  %64 = vst.msk [vmem:[#allocation2 + $0x1b8] sm:$0xff] %vm8, 0.0
  %65 = vst.msk [vmem:[#allocation2 + $0x1c0] sm:$0xff] %vm8, 0.0
  %66 = vst.msk [vmem:[#allocation2 + $0x1c8] sm:$0xff] %vm8, 0.0
  %67 = vst.msk [vmem:[#allocation2 + $0x1d0] sm:$0xff] %vm8, 0.0
  %68 = vst.msk [vmem:[#allocation2 + $0x1d8] sm:$0xff] %vm8, 0.0
  %69 = vst.msk [vmem:[#allocation2 + $0x1e0] sm:$0xff] %vm8, 0.0
  %70 = vst.msk [vmem:[#allocation2 + $0x1e8] sm:$0xff] %vm8, 0.0
  %71 = vst.msk [vmem:[#allocation2 + $0x1f0] sm:$0xff] %vm8, 0.0
  %72 = vst.msk [vmem:[#allocation2 + $0x1f8] sm:$0xff] %vm8, 0.0
  %73 = vst.msk [vmem:[#allocation2 + $0x200] sm:$0xff] %vm8, 0.0
  %74 = vst.msk [vmem:[#allocation2 + $0x208] sm:$0xff] %vm8, 0.0
  %75 = vst.msk [vmem:[#allocation2 + $0x210] sm:$0xff] %vm8, 0.0
  %76 = vst.msk [vmem:[#allocation2 + $0x218] sm:$0xff] %vm8, 0.0
  %77 = vst.msk [vmem:[#allocation2 + $0x220] sm:$0xff] %vm8, 0.0
  %78 = vst.msk [vmem:[#allocation2 + $0x228] sm:$0xff] %vm8, 0.0
  %79 = vst.msk [vmem:[#allocation2 + $0x230] sm:$0xff] %vm8, 0.0
  %80 = vst.msk [vmem:[#allocation2 + $0x238] sm:$0xff] %vm8, 0.0
  %v81 = vld [vmem:[%s0] sm:$0xff]
  %v82 = vld [vmem:[%s0 + $0x8] sm:$0xff]
  %v83 = vld [vmem:[%s0 + $0x10] sm:$0xff]
  %v84 = vld [vmem:[%s0 + $0x18] sm:$0xff]
  %v85 = vld [vmem:[%s0 + $0x20] sm:$0xff]
  %v86 = vld [vmem:[%s0 + $0x28] sm:$0xff]
  %v87 = vld [vmem:[%s0 + $0x30] sm:$0xff]
  %v88 = vld [vmem:[%s0 + $0x38] sm:$0xff]
  %v89 = vld [vmem:[%s0 + $0x40] sm:$0xff]
  %v90 = vld [vmem:[%s0 + $0x48] sm:$0xff]
  %v91 = vld [vmem:[%s0 + $0x50] sm:$0xff]
  %v92 = vld [vmem:[%s0 + $0x58] sm:$0xff]
  %v93 = vld [vmem:[%s0 + $0x60] sm:$0xff]
  %v94 = vld [vmem:[%s0 + $0x68] sm:$0xff]
  %v95 = vld [vmem:[%s0 + $0x70] sm:$0xff]
  %v96 = vld [vmem:[%s0 + $0x78] sm:$0xff]
  %v97 = vld [vmem:[%s0 + $0x80] sm:$0xff]
  %v98 = vld [vmem:[%s0 + $0x88] sm:$0xff]
  %v99 = vld [vmem:[%s0 + $0x90] sm:$0xff]
  %v100 = vld [vmem:[%s0 + $0x98] sm:$0xff]
  %v101 = vld [vmem:[%s0 + $0xa0] sm:$0xff]
  %v102 = vld [vmem:[%s0 + $0xa8] sm:$0xff]
  %v103 = vld [vmem:[%s0 + $0xb0] sm:$0xff]
  %v104 = vld [vmem:[%s0 + $0xb8] sm:$0xff]
  %v105 = vld [vmem:[%s0 + $0xc0] sm:$0xff]
  %v106 = vld [vmem:[%s0 + $0xc8] sm:$0xff]
  %v107 = vld [vmem:[%s0 + $0xd0] sm:$0xff]
  %v108 = vld [vmem:[%s0 + $0xd8] sm:$0xff]
  %v109 = vld [vmem:[%s0 + $0xe0] sm:$0xff]
  %v110 = vld [vmem:[%s0 + $0xe8] sm:$0xff]
  %v111 = vld [vmem:[%s0 + $0xf0] sm:$0xff]
  %v112 = vld [vmem:[%s0 + $0xf8] sm:$0xff]
  %s113 = scalar_lea.vmem [#allocation2], 32
  %114 = vst.msk [vmem:[%s113 + $0x8] sm:$0xff] %vm8, %v81
  %115 = vst.msk [vmem:[%s113 + $0x10] sm:$0xff] %vm8, %v82
  %116 = vst.msk [vmem:[%s113 + $0x28] sm:$0xff] %vm8, %v83
  %117 = vst.msk [vmem:[%s113 + $0x30] sm:$0xff] %vm8, %v84
  %118 = vst.msk [vmem:[%s113 + $0x48] sm:$0xff] %vm8, %v85
  %119 = vst.msk [vmem:[%s113 + $0x50] sm:$0xff] %vm8, %v86
  %120 = vst.msk [vmem:[%s113 + $0x68] sm:$0xff] %vm8, %v87
  %121 = vst.msk [vmem:[%s113 + $0x70] sm:$0xff] %vm8, %v88
  %122 = vst.msk [vmem:[%s113 + $0x88] sm:$0xff] %vm8, %v89
  %123 = vst.msk [vmem:[%s113 + $0x90] sm:$0xff] %vm8, %v90
  %124 = vst.msk [vmem:[%s113 + $0xa8] sm:$0xff] %vm8, %v91
  %125 = vst.msk [vmem:[%s113 + $0xb0] sm:$0xff] %vm8, %v92
  %126 = vst.msk [vmem:[%s113 + $0xc8] sm:$0xff] %vm8, %v93
  %127 = vst.msk [vmem:[%s113 + $0xd0] sm:$0xff] %vm8, %v94
  %128 = vst.msk [vmem:[%s113 + $0xe8] sm:$0xff] %vm8, %v95
  %129 = vst.msk [vmem:[%s113 + $0xf0] sm:$0xff] %vm8, %v96
  %130 = vst.msk [vmem:[%s113 + $0x108] sm:$0xff] %vm8, %v97
  %131 = vst.msk [vmem:[%s113 + $0x110] sm:$0xff] %vm8, %v98
  %132 = vst.msk [vmem:[%s113 + $0x128] sm:$0xff] %vm8, %v99
  %133 = vst.msk [vmem:[%s113 + $0x130] sm:$0xff] %vm8, %v100
  %134 = vst.msk [vmem:[%s113 + $0x148] sm:$0xff] %vm8, %v101
  %135 = vst.msk [vmem:[%s113 + $0x150] sm:$0xff] %vm8, %v102
  %136 = vst.msk [vmem:[%s113 + $0x168] sm:$0xff] %vm8, %v103
  %137 = vst.msk [vmem:[%s113 + $0x170] sm:$0xff] %vm8, %v104
  %138 = vst.msk [vmem:[%s113 + $0x188] sm:$0xff] %vm8, %v105
  %139 = vst.msk [vmem:[%s113 + $0x190] sm:$0xff] %vm8, %v106
  %140 = vst.msk [vmem:[%s113 + $0x1a8] sm:$0xff] %vm8, %v107
  %141 = vst.msk [vmem:[%s113 + $0x1b0] sm:$0xff] %vm8, %v108
  %142 = vst.msk [vmem:[%s113 + $0x1c8] sm:$0xff] %vm8, %v109
  %143 = vst.msk [vmem:[%s113 + $0x1d0] sm:$0xff] %vm8, %v110
  %144 = vst.msk [vmem:[%s113 + $0x1e8] sm:$0xff] %vm8, %v111
  %145 = vst.msk [vmem:[%s113 + $0x1f0] sm:$0xff] %vm8, %v112
  %v146 = vld [vmem:[#allocation2 + $0x7] sm:$0xff]
  %v147 = vld [vmem:[#allocation2 + $0xf] sm:$0xff]
  %v148 = vld [vmem:[#allocation2 + $0x17] sm:$0x3]
  %v149 = vld [vmem:[#allocation2 + $0x27] sm:$0xff]
  %v150 = vld [vmem:[#allocation2 + $0x2f] sm:$0xff]
  %v151 = vld [vmem:[#allocation2 + $0x37] sm:$0x3]
  %v152 = vld [vmem:[#allocation2 + $0x47] sm:$0xff]
  %v153 = vld [vmem:[#allocation2 + $0x4f] sm:$0xff]
  %v154 = vld [vmem:[#allocation2 + $0x57] sm:$0x3]
  %v155 = vld [vmem:[#allocation2 + $0x67] sm:$0xff]
  %v156 = vld [vmem:[#allocation2 + $0x6f] sm:$0xff]
  %v157 = vld [vmem:[#allocation2 + $0x77] sm:$0x3]
  %v158 = vld [vmem:[#allocation2 + $0x87] sm:$0xff]
  %v159 = vld [vmem:[#allocation2 + $0x8f] sm:$0xff]
  %v160 = vld [vmem:[#allocation2 + $0x97] sm:$0x3]
  %v161 = vld [vmem:[#allocation2 + $0xa7] sm:$0xff]
  %v162 = vld [vmem:[#allocation2 + $0xaf] sm:$0xff]
  %v163 = vld [vmem:[#allocation2 + $0xb7] sm:$0x3]
  %v164 = vld [vmem:[#allocation2 + $0xc7] sm:$0xff]
  %v165 = vld [vmem:[#allocation2 + $0xcf] sm:$0xff]
  %v166 = vld [vmem:[#allocation2 + $0xd7] sm:$0x3]
  %v167 = vld [vmem:[#allocation2 + $0xe7] sm:$0xff]
  %v168 = vld [vmem:[#allocation2 + $0xef] sm:$0xff]
  %v169 = vld [vmem:[#allocation2 + $0xf7] sm:$0x3]
  %v170 = vld [vmem:[#allocation2 + $0x107] sm:$0xff]
  %v171 = vld [vmem:[#allocation2 + $0x10f] sm:$0xff]
  %v172 = vld [vmem:[#allocation2 + $0x117] sm:$0x3]
  %v173 = vld [vmem:[#allocation2 + $0x127] sm:$0xff]
  %v174 = vld [vmem:[#allocation2 + $0x12f] sm:$0xff]
  %v175 = vld [vmem:[#allocation2 + $0x137] sm:$0x3]
  %v176 = vld [vmem:[#allocation2 + $0x147] sm:$0xff]
  %v177 = vld [vmem:[#allocation2 + $0x14f] sm:$0xff]
  %v178 = vld [vmem:[#allocation2 + $0x157] sm:$0x3]
  %v179 = vld [vmem:[#allocation2 + $0x167] sm:$0xff]
  %v180 = vld [vmem:[#allocation2 + $0x16f] sm:$0xff]
  %v181 = vld [vmem:[#allocation2 + $0x177] sm:$0x3]
  %v182 = vld [vmem:[#allocation2 + $0x187] sm:$0xff]
  %v183 = vld [vmem:[#allocation2 + $0x18f] sm:$0xff]
  %v184 = vld [vmem:[#allocation2 + $0x197] sm:$0x3]
  %v185 = vld [vmem:[#allocation2 + $0x1a7] sm:$0xff]
  %v186 = vld [vmem:[#allocation2 + $0x1af] sm:$0xff]
  %v187 = vld [vmem:[#allocation2 + $0x1b7] sm:$0x3]
  %v188 = vld [vmem:[#allocation2 + $0x1c7] sm:$0xff]
  %v189 = vld [vmem:[#allocation2 + $0x1cf] sm:$0xff]
  %v190 = vld [vmem:[#allocation2 + $0x1d7] sm:$0x3]
  %v191 = vld [vmem:[#allocation2 + $0x1e7] sm:$0xff]
  %v192 = vld [vmem:[#allocation2 + $0x1ef] sm:$0xff]
  %v193 = vld [vmem:[#allocation2 + $0x1f7] sm:$0x3]
  %v194 = vld [vmem:[%s113 + $0x7] sm:$0xff]
  %v195 = vld [vmem:[%s113 + $0xf] sm:$0xff]
  %v196 = vld [vmem:[%s113 + $0x17] sm:$0x3]
  %v197 = vld [vmem:[%s113 + $0x27] sm:$0xff]
  %v198 = vld [vmem:[%s113 + $0x2f] sm:$0xff]
  %v199 = vld [vmem:[%s113 + $0x37] sm:$0x3]
  %v200 = vld [vmem:[%s113 + $0x47] sm:$0xff]
  %v201 = vld [vmem:[%s113 + $0x4f] sm:$0xff]
  %v202 = vld [vmem:[%s113 + $0x57] sm:$0x3]
  %v203 = vld [vmem:[%s113 + $0x67] sm:$0xff]
  %v204 = vld [vmem:[%s113 + $0x6f] sm:$0xff]
  %v205 = vld [vmem:[%s113 + $0x77] sm:$0x3]
  %v206 = vld [vmem:[%s113 + $0x87] sm:$0xff]
  %v207 = vld [vmem:[%s113 + $0x8f] sm:$0xff]
  %v208 = vld [vmem:[%s113 + $0x97] sm:$0x3]
  %v209 = vld [vmem:[%s113 + $0xa7] sm:$0xff]
  %v210 = vld [vmem:[%s113 + $0xaf] sm:$0xff]
  %v211 = vld [vmem:[%s113 + $0xb7] sm:$0x3]
  %v212 = vld [vmem:[%s113 + $0xc7] sm:$0xff]
  %v213 = vld [vmem:[%s113 + $0xcf] sm:$0xff]
  %v214 = vld [vmem:[%s113 + $0xd7] sm:$0x3]
  %v215 = vld [vmem:[%s113 + $0xe7] sm:$0xff]
  %v216 = vld [vmem:[%s113 + $0xef] sm:$0xff]
  %v217 = vld [vmem:[%s113 + $0xf7] sm:$0x3]
  %v218 = vld [vmem:[%s113 + $0x107] sm:$0xff]
  %v219 = vld [vmem:[%s113 + $0x10f] sm:$0xff]
  %v220 = vld [vmem:[%s113 + $0x117] sm:$0x3]
  %v221 = vld [vmem:[%s113 + $0x127] sm:$0xff]
  %v222 = vld [vmem:[%s113 + $0x12f] sm:$0xff]
  %v223 = vld [vmem:[%s113 + $0x137] sm:$0x3]
  %v224 = vld [vmem:[%s113 + $0x147] sm:$0xff]
  %v225 = vld [vmem:[%s113 + $0x14f] sm:$0xff]
  %v226 = vld [vmem:[%s113 + $0x157] sm:$0x3]
  %v227 = vld [vmem:[%s113 + $0x167] sm:$0xff]
  %v228 = vld [vmem:[%s113 + $0x16f] sm:$0xff]
  %v229 = vld [vmem:[%s113 + $0x177] sm:$0x3]
  %v230 = vld [vmem:[%s113 + $0x187] sm:$0xff]
  %v231 = vld [vmem:[%s113 + $0x18f] sm:$0xff]
  %v232 = vld [vmem:[%s113 + $0x197] sm:$0x3]
  %v233 = vld [vmem:[%s113 + $0x1a7] sm:$0xff]
  %v234 = vld [vmem:[%s113 + $0x1af] sm:$0xff]
  %v235 = vld [vmem:[%s113 + $0x1b7] sm:$0x3]
  %v236 = vld [vmem:[%s113 + $0x1c7] sm:$0xff]
  %v237 = vld [vmem:[%s113 + $0x1cf] sm:$0xff]
  %v238 = vld [vmem:[%s113 + $0x1d7] sm:$0x3]
  %v239 = vld [vmem:[%s113 + $0x1e7] sm:$0xff]
  %v240 = vld [vmem:[%s113 + $0x1ef] sm:$0xff]
  %v241 = vld [vmem:[%s113 + $0x1f7] sm:$0x3]
  %v242 = vadd.f32 %v194, %v194
  %v243 = vadd.f32 %v195, %v195
  %v244 = vadd.f32 %v196, %v196
  %v245 = vadd.f32 %v197, %v197
  %v246 = vadd.f32 %v198, %v198
  %v247 = vadd.f32 %v199, %v199
  %v248 = vadd.f32 %v200, %v200
  %v249 = vadd.f32 %v201, %v201
  %v250 = vadd.f32 %v202, %v202
  %v251 = vadd.f32 %v203, %v203
  %v252 = vadd.f32 %v204, %v204
  %v253 = vadd.f32 %v205, %v205
  %v254 = vadd.f32 %v206, %v206
  %v255 = vadd.f32 %v207, %v207
  %v256 = vadd.f32 %v208, %v208
  %v257 = vadd.f32 %v209, %v209
  %v258 = vadd.f32 %v210, %v210
  %v259 = vadd.f32 %v211, %v211
  %v260 = vadd.f32 %v212, %v212
  %v261 = vadd.f32 %v213, %v213
  %v262 = vadd.f32 %v214, %v214
  %v263 = vadd.f32 %v215, %v215
  %v264 = vadd.f32 %v216, %v216
  %v265 = vadd.f32 %v217, %v217
  %v266 = vadd.f32 %v218, %v218
  %v267 = vadd.f32 %v219, %v219
  %v268 = vadd.f32 %v220, %v220
  %v269 = vadd.f32 %v221, %v221
  %v270 = vadd.f32 %v222, %v222
  %v271 = vadd.f32 %v223, %v223
  %v272 = vadd.f32 %v224, %v224
  %v273 = vadd.f32 %v225, %v225
  %v274 = vadd.f32 %v226, %v226
  %v275 = vadd.f32 %v227, %v227
  %v276 = vadd.f32 %v228, %v228
  %v277 = vadd.f32 %v229, %v229
  %v278 = vadd.f32 %v230, %v230
  %v279 = vadd.f32 %v231, %v231
  %v280 = vadd.f32 %v232, %v232
  %v281 = vadd.f32 %v233, %v233
  %v282 = vadd.f32 %v234, %v234
  %v283 = vadd.f32 %v235, %v235
  %v284 = vadd.f32 %v236, %v236
  %v285 = vadd.f32 %v237, %v237
  %v286 = vadd.f32 %v238, %v238
  %v287 = vadd.f32 %v239, %v239
  %v288 = vadd.f32 %v240, %v240
  %v289 = vadd.f32 %v241, %v241
  %v290 = vadd.f32 %v146, %v242
  %v291 = vadd.f32 %v147, %v243
  %v292 = vadd.f32 %v148, %v244
  %v293 = vadd.f32 %v149, %v245
  %v294 = vadd.f32 %v150, %v246
  %v295 = vadd.f32 %v151, %v247
  %v296 = vadd.f32 %v152, %v248
  %v297 = vadd.f32 %v153, %v249
  %v298 = vadd.f32 %v154, %v250
  %v299 = vadd.f32 %v155, %v251
  %v300 = vadd.f32 %v156, %v252
  %v301 = vadd.f32 %v157, %v253
  %v302 = vadd.f32 %v158, %v254
  %v303 = vadd.f32 %v159, %v255
  %v304 = vadd.f32 %v160, %v256
  %v305 = vadd.f32 %v161, %v257
  %v306 = vadd.f32 %v162, %v258
  %v307 = vadd.f32 %v163, %v259
  %v308 = vadd.f32 %v164, %v260
  %v309 = vadd.f32 %v165, %v261
  %v310 = vadd.f32 %v166, %v262
  %v311 = vadd.f32 %v167, %v263
  %v312 = vadd.f32 %v168, %v264
  %v313 = vadd.f32 %v169, %v265
  %v314 = vadd.f32 %v170, %v266
  %v315 = vadd.f32 %v171, %v267
  %v316 = vadd.f32 %v172, %v268
  %v317 = vadd.f32 %v173, %v269
  %v318 = vadd.f32 %v174, %v270
  %v319 = vadd.f32 %v175, %v271
  %v320 = vadd.f32 %v176, %v272
  %v321 = vadd.f32 %v177, %v273
  %v322 = vadd.f32 %v178, %v274
  %v323 = vadd.f32 %v179, %v275
  %v324 = vadd.f32 %v180, %v276
  %v325 = vadd.f32 %v181, %v277
  %v326 = vadd.f32 %v182, %v278
  %v327 = vadd.f32 %v183, %v279
  %v328 = vadd.f32 %v184, %v280
  %v329 = vadd.f32 %v185, %v281
  %v330 = vadd.f32 %v186, %v282
  %v331 = vadd.f32 %v187, %v283
  %v332 = vadd.f32 %v188, %v284
  %v333 = vadd.f32 %v189, %v285
  %v334 = vadd.f32 %v190, %v286
  %v335 = vadd.f32 %v191, %v287
  %v336 = vadd.f32 %v192, %v288
  %v337 = vadd.f32 %v193, %v289
  %s338 = scalar_lea.vmem [#allocation2], 64
  %v339 = vld [vmem:[%s338 + $0x7] sm:$0xff]
  %v340 = vld [vmem:[%s338 + $0xf] sm:$0xff]
  %v341 = vld [vmem:[%s338 + $0x17] sm:$0x3]
  %v342 = vld [vmem:[%s338 + $0x27] sm:$0xff]
  %v343 = vld [vmem:[%s338 + $0x2f] sm:$0xff]
  %v344 = vld [vmem:[%s338 + $0x37] sm:$0x3]
  %v345 = vld [vmem:[%s338 + $0x47] sm:$0xff]
  %v346 = vld [vmem:[%s338 + $0x4f] sm:$0xff]
  %v347 = vld [vmem:[%s338 + $0x57] sm:$0x3]
  %v348 = vld [vmem:[%s338 + $0x67] sm:$0xff]
  %v349 = vld [vmem:[%s338 + $0x6f] sm:$0xff]
  %v350 = vld [vmem:[%s338 + $0x77] sm:$0x3]
  %v351 = vld [vmem:[%s338 + $0x87] sm:$0xff]
  %v352 = vld [vmem:[%s338 + $0x8f] sm:$0xff]
  %v353 = vld [vmem:[%s338 + $0x97] sm:$0x3]
  %v354 = vld [vmem:[%s338 + $0xa7] sm:$0xff]
  %v355 = vld [vmem:[%s338 + $0xaf] sm:$0xff]
  %v356 = vld [vmem:[%s338 + $0xb7] sm:$0x3]
  %v357 = vld [vmem:[%s338 + $0xc7] sm:$0xff]
  %v358 = vld [vmem:[%s338 + $0xcf] sm:$0xff]
  %v359 = vld [vmem:[%s338 + $0xd7] sm:$0x3]
  %v360 = vld [vmem:[%s338 + $0xe7] sm:$0xff]
  %v361 = vld [vmem:[%s338 + $0xef] sm:$0xff]
  %v362 = vld [vmem:[%s338 + $0xf7] sm:$0x3]
  %v363 = vld [vmem:[%s338 + $0x107] sm:$0xff]
  %v364 = vld [vmem:[%s338 + $0x10f] sm:$0xff]
  %v365 = vld [vmem:[%s338 + $0x117] sm:$0x3]
  %v366 = vld [vmem:[%s338 + $0x127] sm:$0xff]
  %v367 = vld [vmem:[%s338 + $0x12f] sm:$0xff]
  %v368 = vld [vmem:[%s338 + $0x137] sm:$0x3]
  %v369 = vld [vmem:[%s338 + $0x147] sm:$0xff]
  %v370 = vld [vmem:[%s338 + $0x14f] sm:$0xff]
  %v371 = vld [vmem:[%s338 + $0x157] sm:$0x3]
  %v372 = vld [vmem:[%s338 + $0x167] sm:$0xff]
  %v373 = vld [vmem:[%s338 + $0x16f] sm:$0xff]
  %v374 = vld [vmem:[%s338 + $0x177] sm:$0x3]
  %v375 = vld [vmem:[%s338 + $0x187] sm:$0xff]
  %v376 = vld [vmem:[%s338 + $0x18f] sm:$0xff]
  %v377 = vld [vmem:[%s338 + $0x197] sm:$0x3]
  %v378 = vld [vmem:[%s338 + $0x1a7] sm:$0xff]
  %v379 = vld [vmem:[%s338 + $0x1af] sm:$0xff]
  %v380 = vld [vmem:[%s338 + $0x1b7] sm:$0x3]
  %v381 = vld [vmem:[%s338 + $0x1c7] sm:$0xff]
  %v382 = vld [vmem:[%s338 + $0x1cf] sm:$0xff]
  %v383 = vld [vmem:[%s338 + $0x1d7] sm:$0x3]
  %v384 = vld [vmem:[%s338 + $0x1e7] sm:$0xff]
  %v385 = vld [vmem:[%s338 + $0x1ef] sm:$0xff]
  %v386 = vld [vmem:[%s338 + $0x1f7] sm:$0x3]
  %v387 = vadd.f32 %v290, %v339
  %v388 = vadd.f32 %v291, %v340
  %v389 = vadd.f32 %v292, %v341
  %v390 = vadd.f32 %v293, %v342
  %v391 = vadd.f32 %v294, %v343
  %v392 = vadd.f32 %v295, %v344
  %v393 = vadd.f32 %v296, %v345
  %v394 = vadd.f32 %v297, %v346
  %v395 = vadd.f32 %v298, %v347
  %v396 = vadd.f32 %v299, %v348
  %v397 = vadd.f32 %v300, %v349
  %v398 = vadd.f32 %v301, %v350
  %v399 = vadd.f32 %v302, %v351
  %v400 = vadd.f32 %v303, %v352
  %v401 = vadd.f32 %v304, %v353
  %v402 = vadd.f32 %v305, %v354
  %v403 = vadd.f32 %v306, %v355
  %v404 = vadd.f32 %v307, %v356
  %v405 = vadd.f32 %v308, %v357
  %v406 = vadd.f32 %v309, %v358
  %v407 = vadd.f32 %v310, %v359
  %v408 = vadd.f32 %v311, %v360
  %v409 = vadd.f32 %v312, %v361
  %v410 = vadd.f32 %v313, %v362
  %v411 = vadd.f32 %v314, %v363
  %v412 = vadd.f32 %v315, %v364
  %v413 = vadd.f32 %v316, %v365
  %v414 = vadd.f32 %v317, %v366
  %v415 = vadd.f32 %v318, %v367
  %v416 = vadd.f32 %v319, %v368
  %v417 = vadd.f32 %v320, %v369
  %v418 = vadd.f32 %v321, %v370
  %v419 = vadd.f32 %v322, %v371
  %v420 = vadd.f32 %v323, %v372
  %v421 = vadd.f32 %v324, %v373
  %v422 = vadd.f32 %v325, %v374
  %v423 = vadd.f32 %v326, %v375
  %v424 = vadd.f32 %v327, %v376
  %v425 = vadd.f32 %v328, %v377
  %v426 = vadd.f32 %v329, %v378
  %v427 = vadd.f32 %v330, %v379
  %v428 = vadd.f32 %v331, %v380
  %v429 = vadd.f32 %v332, %v381
  %v430 = vadd.f32 %v333, %v382
  %v431 = vadd.f32 %v334, %v383
  %v432 = vadd.f32 %v335, %v384
  %v433 = vadd.f32 %v336, %v385
  %v434 = vadd.f32 %v337, %v386
  %v435 = vadd.f32 %v387, %v387
  %v436 = vadd.f32 %v388, %v388
  %v437 = vadd.f32 %v389, %v389
  %v438 = vadd.f32 %v390, %v390
  %v439 = vadd.f32 %v391, %v391
  %v440 = vadd.f32 %v392, %v392
  %v441 = vadd.f32 %v393, %v393
  %v442 = vadd.f32 %v394, %v394
  %v443 = vadd.f32 %v395, %v395
  %v444 = vadd.f32 %v396, %v396
  %v445 = vadd.f32 %v397, %v397
  %v446 = vadd.f32 %v398, %v398
  %v447 = vadd.f32 %v399, %v399
  %v448 = vadd.f32 %v400, %v400
  %v449 = vadd.f32 %v401, %v401
  %v450 = vadd.f32 %v402, %v402
  %v451 = vadd.f32 %v403, %v403
  %v452 = vadd.f32 %v404, %v404
  %v453 = vadd.f32 %v405, %v405
  %v454 = vadd.f32 %v406, %v406
  %v455 = vadd.f32 %v407, %v407
  %v456 = vadd.f32 %v408, %v408
  %v457 = vadd.f32 %v409, %v409
  %v458 = vadd.f32 %v410, %v410
  %v459 = vadd.f32 %v411, %v411
  %v460 = vadd.f32 %v412, %v412
  %v461 = vadd.f32 %v413, %v413
  %v462 = vadd.f32 %v414, %v414
  %v463 = vadd.f32 %v415, %v415
  %v464 = vadd.f32 %v416, %v416
  %v465 = vadd.f32 %v417, %v417
  %v466 = vadd.f32 %v418, %v418
  %v467 = vadd.f32 %v419, %v419
  %v468 = vadd.f32 %v420, %v420
  %v469 = vadd.f32 %v421, %v421
  %v470 = vadd.f32 %v422, %v422
  %v471 = vadd.f32 %v423, %v423
  %v472 = vadd.f32 %v424, %v424
  %v473 = vadd.f32 %v425, %v425
  %v474 = vadd.f32 %v426, %v426
  %v475 = vadd.f32 %v427, %v427
  %v476 = vadd.f32 %v428, %v428
  %v477 = vadd.f32 %v429, %v429
  %v478 = vadd.f32 %v430, %v430
  %v479 = vadd.f32 %v431, %v431
  %v480 = vadd.f32 %v432, %v432
  %v481 = vadd.f32 %v433, %v433
  %v482 = vadd.f32 %v434, %v434
  %vm531 = vcmask 1046528
  %v532 = vrot.slane %v435, 1
  %v533 = vrot.slane %v436, 1
  %v534 = vsel %vm531, %v532, %v533
  %v535 = vrot.slane %v437, 1
  %v536 = vsel %vm531, %v533, %v535
  %v537 = vrot.slane %v438, 1
  %v538 = vrot.slane %v439, 1
  %v539 = vsel %vm531, %v537, %v538
  %v540 = vrot.slane %v440, 1
  %v541 = vsel %vm531, %v538, %v540
  %v542 = vrot.slane %v441, 1
  %v543 = vrot.slane %v442, 1
  %v544 = vsel %vm531, %v542, %v543
  %v545 = vrot.slane %v443, 1
  %v546 = vsel %vm531, %v543, %v545
  %v547 = vrot.slane %v444, 1
  %v548 = vrot.slane %v445, 1
  %v549 = vsel %vm531, %v547, %v548
  %v550 = vrot.slane %v446, 1
  %v551 = vsel %vm531, %v548, %v550
  %v552 = vrot.slane %v447, 1
  %v553 = vrot.slane %v448, 1
  %v554 = vsel %vm531, %v552, %v553
  %v555 = vrot.slane %v449, 1
  %v556 = vsel %vm531, %v553, %v555
  %v557 = vrot.slane %v450, 1
  %v558 = vrot.slane %v451, 1
  %v559 = vsel %vm531, %v557, %v558
  %v560 = vrot.slane %v452, 1
  %v561 = vsel %vm531, %v558, %v560
  %v562 = vrot.slane %v453, 1
  %v563 = vrot.slane %v454, 1
  %v564 = vsel %vm531, %v562, %v563
  %v565 = vrot.slane %v455, 1
  %v566 = vsel %vm531, %v563, %v565
  %v567 = vrot.slane %v456, 1
  %v568 = vrot.slane %v457, 1
  %v569 = vsel %vm531, %v567, %v568
  %v570 = vrot.slane %v458, 1
  %v571 = vsel %vm531, %v568, %v570
  %v572 = vrot.slane %v459, 1
  %v573 = vrot.slane %v460, 1
  %v574 = vsel %vm531, %v572, %v573
  %v575 = vrot.slane %v461, 1
  %v576 = vsel %vm531, %v573, %v575
  %v577 = vrot.slane %v462, 1
  %v578 = vrot.slane %v463, 1
  %v579 = vsel %vm531, %v577, %v578
  %v580 = vrot.slane %v464, 1
  %v581 = vsel %vm531, %v578, %v580
  %v582 = vrot.slane %v465, 1
  %v583 = vrot.slane %v466, 1
  %v584 = vsel %vm531, %v582, %v583
  %v585 = vrot.slane %v467, 1
  %v586 = vsel %vm531, %v583, %v585
  %v587 = vrot.slane %v468, 1
  %v588 = vrot.slane %v469, 1
  %v589 = vsel %vm531, %v587, %v588
  %v590 = vrot.slane %v470, 1
  %v591 = vsel %vm531, %v588, %v590
  %v592 = vrot.slane %v471, 1
  %v593 = vrot.slane %v472, 1
  %v594 = vsel %vm531, %v592, %v593
  %v595 = vrot.slane %v473, 1
  %v596 = vsel %vm531, %v593, %v595
  %v597 = vrot.slane %v474, 1
  %v598 = vrot.slane %v475, 1
  %v599 = vsel %vm531, %v597, %v598
  %v600 = vrot.slane %v476, 1
  %v601 = vsel %vm531, %v598, %v600
  %v602 = vrot.slane %v477, 1
  %v603 = vrot.slane %v478, 1
  %v604 = vsel %vm531, %v602, %v603
  %v605 = vrot.slane %v479, 1
  %v606 = vsel %vm531, %v603, %v605
  %v607 = vrot.slane %v480, 1
  %v608 = vrot.slane %v481, 1
  %v609 = vsel %vm531, %v607, %v608
  %v610 = vrot.slane %v482, 1
  %v611 = vsel %vm531, %v608, %v610
  %v644 = vadd.f32 %v387, %v534
  %v645 = vadd.f32 %v388, %v536
  %v646 = vadd.f32 %v390, %v539
  %v647 = vadd.f32 %v391, %v541
  %v648 = vadd.f32 %v393, %v544
  %v649 = vadd.f32 %v394, %v546
  %v650 = vadd.f32 %v396, %v549
  %v651 = vadd.f32 %v397, %v551
  %v652 = vadd.f32 %v399, %v554
  %v653 = vadd.f32 %v400, %v556
  %v654 = vadd.f32 %v402, %v559
  %v655 = vadd.f32 %v403, %v561
  %v656 = vadd.f32 %v405, %v564
  %v657 = vadd.f32 %v406, %v566
  %v658 = vadd.f32 %v408, %v569
  %v659 = vadd.f32 %v409, %v571
  %v660 = vadd.f32 %v411, %v574
  %v661 = vadd.f32 %v412, %v576
  %v662 = vadd.f32 %v414, %v579
  %v663 = vadd.f32 %v415, %v581
  %v664 = vadd.f32 %v417, %v584
  %v665 = vadd.f32 %v418, %v586
  %v666 = vadd.f32 %v420, %v589
  %v667 = vadd.f32 %v421, %v591
  %v668 = vadd.f32 %v423, %v594
  %v669 = vadd.f32 %v424, %v596
  %v670 = vadd.f32 %v426, %v599
  %v671 = vadd.f32 %v427, %v601
  %v672 = vadd.f32 %v429, %v604
  %v673 = vadd.f32 %v430, %v606
  %v674 = vadd.f32 %v432, %v609
  %v675 = vadd.f32 %v433, %v611
  %vm724 = vcmask 1045504
  %v725 = vrot.slane %v387, 2
  %v726 = vrot.slane %v388, 2
  %v727 = vsel %vm724, %v725, %v726
  %v728 = vrot.slane %v389, 2
  %v729 = vsel %vm724, %v726, %v728
  %v730 = vrot.slane %v390, 2
  %v731 = vrot.slane %v391, 2
  %v732 = vsel %vm724, %v730, %v731
  %v733 = vrot.slane %v392, 2
  %v734 = vsel %vm724, %v731, %v733
  %v735 = vrot.slane %v393, 2
  %v736 = vrot.slane %v394, 2
  %v737 = vsel %vm724, %v735, %v736
  %v738 = vrot.slane %v395, 2
  %v739 = vsel %vm724, %v736, %v738
  %v740 = vrot.slane %v396, 2
  %v741 = vrot.slane %v397, 2
  %v742 = vsel %vm724, %v740, %v741
  %v743 = vrot.slane %v398, 2
  %v744 = vsel %vm724, %v741, %v743
  %v745 = vrot.slane %v399, 2
  %v746 = vrot.slane %v400, 2
  %v747 = vsel %vm724, %v745, %v746
  %v748 = vrot.slane %v401, 2
  %v749 = vsel %vm724, %v746, %v748
  %v750 = vrot.slane %v402, 2
  %v751 = vrot.slane %v403, 2
  %v752 = vsel %vm724, %v750, %v751
  %v753 = vrot.slane %v404, 2
  %v754 = vsel %vm724, %v751, %v753
  %v755 = vrot.slane %v405, 2
  %v756 = vrot.slane %v406, 2
  %v757 = vsel %vm724, %v755, %v756
  %v758 = vrot.slane %v407, 2
  %v759 = vsel %vm724, %v756, %v758
  %v760 = vrot.slane %v408, 2
  %v761 = vrot.slane %v409, 2
  %v762 = vsel %vm724, %v760, %v761
  %v763 = vrot.slane %v410, 2
  %v764 = vsel %vm724, %v761, %v763
  %v765 = vrot.slane %v411, 2
  %v766 = vrot.slane %v412, 2
  %v767 = vsel %vm724, %v765, %v766
  %v768 = vrot.slane %v413, 2
  %v769 = vsel %vm724, %v766, %v768
  %v770 = vrot.slane %v414, 2
  %v771 = vrot.slane %v415, 2
  %v772 = vsel %vm724, %v770, %v771
  %v773 = vrot.slane %v416, 2
  %v774 = vsel %vm724, %v771, %v773
  %v775 = vrot.slane %v417, 2
  %v776 = vrot.slane %v418, 2
  %v777 = vsel %vm724, %v775, %v776
  %v778 = vrot.slane %v419, 2
  %v779 = vsel %vm724, %v776, %v778
  %v780 = vrot.slane %v420, 2
  %v781 = vrot.slane %v421, 2
  %v782 = vsel %vm724, %v780, %v781
  %v783 = vrot.slane %v422, 2
  %v784 = vsel %vm724, %v781, %v783
  %v785 = vrot.slane %v423, 2
  %v786 = vrot.slane %v424, 2
  %v787 = vsel %vm724, %v785, %v786
  %v788 = vrot.slane %v425, 2
  %v789 = vsel %vm724, %v786, %v788
  %v790 = vrot.slane %v426, 2
  %v791 = vrot.slane %v427, 2
  %v792 = vsel %vm724, %v790, %v791
  %v793 = vrot.slane %v428, 2
  %v794 = vsel %vm724, %v791, %v793
  %v795 = vrot.slane %v429, 2
  %v796 = vrot.slane %v430, 2
  %v797 = vsel %vm724, %v795, %v796
  %v798 = vrot.slane %v431, 2
  %v799 = vsel %vm724, %v796, %v798
  %v800 = vrot.slane %v432, 2
  %v801 = vrot.slane %v433, 2
  %v802 = vsel %vm724, %v800, %v801
  %v803 = vrot.slane %v434, 2
  %v804 = vsel %vm724, %v801, %v803
  %v837 = vadd.f32 %v644, %v727
  %v838 = vadd.f32 %v645, %v729
  %v839 = vadd.f32 %v646, %v732
  %v840 = vadd.f32 %v647, %v734
  %v841 = vadd.f32 %v648, %v737
  %v842 = vadd.f32 %v649, %v739
  %v843 = vadd.f32 %v650, %v742
  %v844 = vadd.f32 %v651, %v744
  %v845 = vadd.f32 %v652, %v747
  %v846 = vadd.f32 %v653, %v749
  %v847 = vadd.f32 %v654, %v752
  %v848 = vadd.f32 %v655, %v754
  %v849 = vadd.f32 %v656, %v757
  %v850 = vadd.f32 %v657, %v759
  %v851 = vadd.f32 %v658, %v762
  %v852 = vadd.f32 %v659, %v764
  %v853 = vadd.f32 %v660, %v767
  %v854 = vadd.f32 %v661, %v769
  %v855 = vadd.f32 %v662, %v772
  %v856 = vadd.f32 %v663, %v774
  %v857 = vadd.f32 %v664, %v777
  %v858 = vadd.f32 %v665, %v779
  %v859 = vadd.f32 %v666, %v782
  %v860 = vadd.f32 %v667, %v784
  %v861 = vadd.f32 %v668, %v787
  %v862 = vadd.f32 %v669, %v789
  %v863 = vadd.f32 %v670, %v792
  %v864 = vadd.f32 %v671, %v794
  %v865 = vadd.f32 %v672, %v797
  %v866 = vadd.f32 %v673, %v799
  %v867 = vadd.f32 %v674, %v802
  %v868 = vadd.f32 %v675, %v804
  %v869 = vmul.f32 %v837, 0.0625
  %v870 = vmul.f32 %v838, 0.0625
  %v871 = vmul.f32 %v839, 0.0625
  %v872 = vmul.f32 %v840, 0.0625
  %v873 = vmul.f32 %v841, 0.0625
  %v874 = vmul.f32 %v842, 0.0625
  %v875 = vmul.f32 %v843, 0.0625
  %v876 = vmul.f32 %v844, 0.0625
  %v877 = vmul.f32 %v845, 0.0625
  %v878 = vmul.f32 %v846, 0.0625
  %v879 = vmul.f32 %v847, 0.0625
  %v880 = vmul.f32 %v848, 0.0625
  %v881 = vmul.f32 %v849, 0.0625
  %v882 = vmul.f32 %v850, 0.0625
  %v883 = vmul.f32 %v851, 0.0625
  %v884 = vmul.f32 %v852, 0.0625
  %v885 = vmul.f32 %v853, 0.0625
  %v886 = vmul.f32 %v854, 0.0625
  %v887 = vmul.f32 %v855, 0.0625
  %v888 = vmul.f32 %v856, 0.0625
  %v889 = vmul.f32 %v857, 0.0625
  %v890 = vmul.f32 %v858, 0.0625
  %v891 = vmul.f32 %v859, 0.0625
  %v892 = vmul.f32 %v860, 0.0625
  %v893 = vmul.f32 %v861, 0.0625
  %v894 = vmul.f32 %v862, 0.0625
  %v895 = vmul.f32 %v863, 0.0625
  %v896 = vmul.f32 %v864, 0.0625
  %v897 = vmul.f32 %v865, 0.0625
  %v898 = vmul.f32 %v866, 0.0625
  %v899 = vmul.f32 %v867, 0.0625
  %v900 = vmul.f32 %v868, 0.0625
  %901 = vst.msk [vmem:[%s1] sm:$0xff] %vm8, %v869
  %902 = vst.msk [vmem:[%s1 + $0x8] sm:$0xff] %vm8, %v870
  %903 = vst.msk [vmem:[%s1 + $0x10] sm:$0xff] %vm8, %v871
  %904 = vst.msk [vmem:[%s1 + $0x18] sm:$0xff] %vm8, %v872
  %905 = vst.msk [vmem:[%s1 + $0x20] sm:$0xff] %vm8, %v873
  %906 = vst.msk [vmem:[%s1 + $0x28] sm:$0xff] %vm8, %v874
  %907 = vst.msk [vmem:[%s1 + $0x30] sm:$0xff] %vm8, %v875
  %908 = vst.msk [vmem:[%s1 + $0x38] sm:$0xff] %vm8, %v876
  %909 = vst.msk [vmem:[%s1 + $0x40] sm:$0xff] %vm8, %v877
  %910 = vst.msk [vmem:[%s1 + $0x48] sm:$0xff] %vm8, %v878
  %911 = vst.msk [vmem:[%s1 + $0x50] sm:$0xff] %vm8, %v879
  %912 = vst.msk [vmem:[%s1 + $0x58] sm:$0xff] %vm8, %v880
  %913 = vst.msk [vmem:[%s1 + $0x60] sm:$0xff] %vm8, %v881
  %914 = vst.msk [vmem:[%s1 + $0x68] sm:$0xff] %vm8, %v882
  %915 = vst.msk [vmem:[%s1 + $0x70] sm:$0xff] %vm8, %v883
  %916 = vst.msk [vmem:[%s1 + $0x78] sm:$0xff] %vm8, %v884
  %917 = vst.msk [vmem:[%s1 + $0x80] sm:$0xff] %vm8, %v885
  %918 = vst.msk [vmem:[%s1 + $0x88] sm:$0xff] %vm8, %v886
  %919 = vst.msk [vmem:[%s1 + $0x90] sm:$0xff] %vm8, %v887
  %920 = vst.msk [vmem:[%s1 + $0x98] sm:$0xff] %vm8, %v888
  %921 = vst.msk [vmem:[%s1 + $0xa0] sm:$0xff] %vm8, %v889
  %922 = vst.msk [vmem:[%s1 + $0xa8] sm:$0xff] %vm8, %v890
  %923 = vst.msk [vmem:[%s1 + $0xb0] sm:$0xff] %vm8, %v891
  %924 = vst.msk [vmem:[%s1 + $0xb8] sm:$0xff] %vm8, %v892
  %925 = vst.msk [vmem:[%s1 + $0xc0] sm:$0xff] %vm8, %v893
  %926 = vst.msk [vmem:[%s1 + $0xc8] sm:$0xff] %vm8, %v894
  %927 = vst.msk [vmem:[%s1 + $0xd0] sm:$0xff] %vm8, %v895
  %928 = vst.msk [vmem:[%s1 + $0xd8] sm:$0xff] %vm8, %v896
  %929 = vst.msk [vmem:[%s1 + $0xe0] sm:$0xff] %vm8, %v897
  %930 = vst.msk [vmem:[%s1 + $0xe8] sm:$0xff] %vm8, %v898
  %931 = vst.msk [vmem:[%s1 + $0xf0] sm:$0xff] %vm8, %v899
  %932 = vst.msk [vmem:[%s1 + $0xf8] sm:$0xff] %vm8, %v900
  // Predicated region
  $region6: #{tpu_custom_call.1} parent=0 // pred_check
    _
  $region7: #{tpu_custom_call.1} parent=0 // pred_check_branch
    %934 = sbr.rel (0) target = $region9
  $region8: #{tpu_custom_call.1} parent=0 // pred_region
    _
  $region9: #{tpu_custom_call.1} parent=0 // pred_fallthru
    _
  // Predicated region
  $region10: #{tpu_custom_call.1} parent=0 // pred_check
    _
  $region11: #{tpu_custom_call.1} parent=0 // pred_check_branch
    %936 = sbr.rel (0) target = $region13
  $region12: #{tpu_custom_call.1} parent=0 // pred_region
    _
  $region13: #{tpu_custom_call.1} parent=0 // pred_fallthru
    _

</llo_original>
